<compile_context>
chip_gen: v6e
topology: v6e:2x2x1
jax: 0.10.0
libtpu: 0.0.40
codegen_flags: <defaults>
</compile_context>

<pallas_src>
import math

import jax
import jax.numpy as jnp
from jax.experimental import pallas as pl
from jax.experimental.pallas import tpu as pltpu

LANE = 128      # lane width
OUT_PAD = 128   # lane-dense padded class dimension (real classes in lanes 0..9)


def _round_up(n, m):
    return ((n + m - 1) // m) * m


def addnet_kernel(x_ref, b1_ref, c1_ref, b2_ref, c2_ref, mask_ref, o_ref):
    x = x_ref[...]                                            # (TB, 784) f32
    # --- layer 1 sum: s1[b] = sum_i x[b,i] ---
    s1 = jnp.sum(x, axis=-1, keepdims=True)                   # (TB, 1)

    # --- LinearAdderV1(784,784)+ReLU fused into the layer-2 row sum:
    #     s2[b] = sum_o relu(s1[b]*b1[o] + c1[o]),
    #     accumulated over 128-lane chunks so no (TB, 784) temp is stored.
    #     Padded hidden lanes have b1=c1=0 -> relu(0)=0 contributes nothing.
    n_chunks = b1_ref.shape[1] // LANE                        # static (7)
    s2 = jnp.zeros_like(s1)                                   # (TB, 1)
    for c in range(n_chunks):
        b1c = b1_ref[:, c * LANE:(c + 1) * LANE]              # (1, 128)
        c1c = c1_ref[:, c * LANE:(c + 1) * LANE]              # (1, 128)
        h1c = jnp.maximum(s1 * b1c + c1c, 0.0)                # (TB, 128)
        s2 = s2 + jnp.sum(h1c, axis=-1, keepdims=True)

    # --- LinearAdderV1(784,10)+ReLU on the padded 128-lane class dim ---
    h2 = jnp.maximum(s2 * b2_ref[...] + c2_ref[...], 0.0)     # (TB, 128)

    # --- Softmax over the real classes. Padded lanes are exactly 0 and
    #     ReLU makes every real lane >= 0, so max over all 128 lanes equals
    #     max over real lanes; the resident 0/1 mask zeros padded exp terms.
    m = jnp.max(h2, axis=-1, keepdims=True)                   # (TB, 1)
    e = jnp.exp(h2 - m) * mask_ref[...]                       # padded lanes -> 0
    denom = jnp.sum(e, axis=-1, keepdims=True)                # >= 1 (safe)
    # Exact reciprocal (approx=True would exceed the 1e-5 reference tolerance).
    o_ref[...] = e * pl.reciprocal(denom, approx=False)


def prepare_addnet_params(w1, b1, w2, b2):
    """One-time, weight-only precompute (cache this; do NOT redo per call)."""
    hid = w1.shape[0]
    out_f = w2.shape[0]
    hid_pad = _round_up(hid, LANE)                            # 784 -> 896

    b1_pad = jnp.zeros((1, hid_pad), jnp.float32).at[0, :hid].set(
        b1.astype(jnp.float32))
    c1_pad = jnp.zeros((1, hid_pad), jnp.float32).at[0, :hid].set(
        (jnp.sum(w1, axis=-1) * b1).astype(jnp.float32))
    b2_pad = jnp.zeros((1, OUT_PAD), jnp.float32).at[0, :out_f].set(
        b2.astype(jnp.float32))
    c2_pad = jnp.zeros((1, OUT_PAD), jnp.float32).at[0, :out_f].set(
        (jnp.sum(w2, axis=-1) * b2).astype(jnp.float32))
    mask = jnp.zeros((1, OUT_PAD), jnp.float32).at[0, :out_f].set(1.0)

    return {"b1": b1_pad, "c1": c1_pad, "b2": b2_pad, "c2": c2_pad,
            "mask": mask, "num_classes": out_f}


def addnet_forward(x, params, *, max_batch_tile=1024):
    """x: (B, 1, 28, 28) or (B, 784) float32 -> (B, 10) float32."""
    B = x.shape[0]
    x2d = x.reshape(B, -1).astype(jnp.float32)                # flatten (glue)
    in_f = x2d.shape[1]

    b1, c1 = params["b1"], params["c1"]
    b2, c2, mask = params["b2"], params["c2"], params["mask"]
    out_f = params["num_classes"]
    hid_pad = b1.shape[1]

    # Balanced batch tiling (minimize padding); force >= 2 grid steps once the
    # batch is big enough so both v7x TensorCores get work.
    num_tiles = pl.cdiv(B, max_batch_tile)
    if B >= 16:
        num_tiles = max(num_tiles, 2)
    tb = _round_up(pl.cdiv(B, num_tiles), 8)
    num_tiles = pl.cdiv(B, tb)
    b_pad = num_tiles * tb
    if b_pad != B:
        x2d = jnp.pad(x2d, ((0, b_pad - B), (0, 0)))

    # Double-buffered x tile + output tile, 1.5x headroom, 32 MiB floor
    # (safe on v5e/v6e's 128 MiB and v7x's 64 MiB physical VMEM).
    vmem_needed = 2 * tb * in_f * 4 + 2 * tb * OUT_PAD * 4
    vmem_limit = max(int(1.5 * vmem_needed) + (4 << 20), 32 << 20)

    cost = pl.CostEstimate(
        flops=int(b_pad * (in_f + 3 * hid_pad + 4 * OUT_PAD)),
        transcendentals=int(b_pad * out_f),
        bytes_accessed=int(4 * (b_pad * in_f + b_pad * OUT_PAD
                                + 2 * hid_pad + 3 * OUT_PAD)),
    )

    out_pad = pl.pallas_call(
        addnet_kernel,
        out_shape=jax.ShapeDtypeStruct((b_pad, OUT_PAD), jnp.float32),
        grid=(num_tiles,),
        in_specs=[
            pl.BlockSpec((tb, in_f), lambda i: (i, 0)),       # x tile (pipelined)
            pl.BlockSpec((1, hid_pad), lambda i: (0, 0)),     # b1 (resident)
            pl.BlockSpec((1, hid_pad), lambda i: (0, 0)),     # c1 = rowsum(W1)*b1
            pl.BlockSpec((1, OUT_PAD), lambda i: (0, 0)),     # b2 (padded)
            pl.BlockSpec((1, OUT_PAD), lambda i: (0, 0)),     # c2 = rowsum(W2)*b2
            pl.BlockSpec((1, OUT_PAD), lambda i: (0, 0)),     # softmax class mask
        ],
        out_specs=pl.BlockSpec((tb, OUT_PAD), lambda i: (i, 0)),
        compiler_params=pltpu.CompilerParams(
            dimension_semantics=("parallel",),
            vmem_limit_bytes=vmem_limit,
        ),
        cost_estimate=cost,
    )(x2d, b1, c1, b2, c2, mask)

    # Drop batch padding and the padded class lanes (glue).
    return out_pad[:B, :out_f]


def init_params(key):
    """Deterministic init matching the module's shapes / bound scale."""
    k1, k2, k3, k4 = jax.random.split(key, 4)
    in_f, hid, out_f = 784, 784, 10
    # kaiming_uniform_(a=sqrt(5)) on an (out, in) matrix -> bound = 1/sqrt(fan_in)
    bound1 = 1.0 / math.sqrt(in_f)
    w1 = jax.random.uniform(k1, (hid, in_f), jnp.float32, -bound1, bound1)
    b1 = jax.random.uniform(k2, (hid,), jnp.float32, -bound1, bound1)
    bound2 = 1.0 / math.sqrt(hid)
    w2 = jax.random.uniform(k3, (out_f, hid), jnp.float32, -bound2, bound2)
    b2 = jax.random.uniform(k4, (out_f,), jnp.float32, -bound2, bound2)
    return w1, b1, w2, b2


def reference_forward(x, w1, b1, w2, b2):
    """Pure-JAX reference of the PyTorch forward, for a sanity check."""
    B = x.shape[0]
    x2d = x.reshape(B, -1).astype(jnp.float32)
    h1 = (jnp.sum(x2d, -1, keepdims=True) + jnp.sum(w1, -1)[None, :]) * b1[None, :]
    h1 = jnp.maximum(h1, 0.0)
    h2 = (jnp.sum(h1, -1, keepdims=True) + jnp.sum(w2, -1)[None, :]) * b2[None, :]
    h2 = jnp.maximum(h2, 0.0)
    return jax.nn.softmax(h2, axis=1)


if __name__ == "__main__":
    key = jax.random.PRNGKey(0)
    kx, kp = jax.random.split(key)
    # Small batch; spatial 28x28 is fixed by the module's in_features=784.
    x = jax.random.normal(kx, (2, 1, 28, 28), jnp.float32)
    w1, b1, w2, b2 = init_params(kp)

    # One-time (cacheable) weight precompute, hoisted out of the forward.
    params = prepare_addnet_params(w1, b1, w2, b2)

    out = addnet_forward(x, params)
    out = jax.block_until_ready(out)

    ref = reference_forward(x, w1, b1, w2, b2)
    assert out.shape == (2, 10)
    assert jnp.allclose(out, ref, atol=1e-5, rtol=1e-5), "mismatch vs reference"
    print("KERNEL_OK")
</pallas_src>

<mosaic_0001>
module attributes {stable_mosaic.version = 11 : i64} {
  func.func @addnet_kernel(%arg0: i32, %arg1: memref<8x784xf32, #tpu.memory_space<vmem>>, %arg2: memref<1x896xf32, #tpu.memory_space<vmem>>, %arg3: memref<1x896xf32, #tpu.memory_space<vmem>>, %arg4: memref<1x128xf32, #tpu.memory_space<vmem>>, %arg5: memref<1x128xf32, #tpu.memory_space<vmem>>, %arg6: memref<1x128xf32, #tpu.memory_space<vmem>>, %arg7: memref<8x128xf32, #tpu.memory_space<vmem>>) attributes {dimension_semantics = [#tpu.dimension_semantics<parallel>], iteration_bounds = array<i64: 1>, scalar_prefetch = 0 : i64, scratch_operands = 0 : i64, tpu.core_type = #tpu.core_type<tc>, window_params = [{transform_indices = @transform_0, window_bounds = array<i64: 8, 784>}, {pipeline_mode = #tpu.pipeline_mode<synchronous>, transform_indices = @transform_1, window_bounds = array<i64: 1, 896>}, {pipeline_mode = #tpu.pipeline_mode<synchronous>, transform_indices = @transform_2, window_bounds = array<i64: 1, 896>}, {pipeline_mode = #tpu.pipeline_mode<synchronous>, transform_indices = @transform_3, window_bounds = array<i64: 1, 128>}, {pipeline_mode = #tpu.pipeline_mode<synchronous>, transform_indices = @transform_4, window_bounds = array<i64: 1, 128>}, {pipeline_mode = #tpu.pipeline_mode<synchronous>, transform_indices = @transform_5, window_bounds = array<i64: 1, 128>}, {transform_indices = @transform_6, window_bounds = array<i64: 8, 128>}]} {
    %c0 = arith.constant 0 : index
    %c0_0 = arith.constant 0 : index
    %0 = vector.load %arg1[%c0, %c0_0] : memref<8x784xf32, #tpu.memory_space<vmem>>, vector<8x784xf32>
    %cst = arith.constant dense<0.000000e+00> : vector<8xf32>
    %1 = vector.multi_reduction <add>, %0, %cst [1] : vector<8x784xf32> to vector<8xf32>
    %2 = vector.shape_cast %1 : vector<8xf32> to vector<8x1xf32>
    %cst_1 = arith.constant 0.000000e+00 : f32
    %3 = vector.broadcast %cst_1 : f32 to vector<8x1xf32>
    %c0_2 = arith.constant 0 : index
    %c0_3 = arith.constant 0 : index
    %4 = vector.load %arg2[%c0_2, %c0_3] : memref<1x896xf32, #tpu.memory_space<vmem>>, vector<1x128xf32>
    %c0_4 = arith.constant 0 : index
    %c0_5 = arith.constant 0 : index
    %5 = vector.load %arg3[%c0_4, %c0_5] : memref<1x896xf32, #tpu.memory_space<vmem>>, vector<1x128xf32>
    %6 = vector.broadcast %2 : vector<8x1xf32> to vector<8x128xf32>
    %7 = vector.broadcast %4 : vector<1x128xf32> to vector<8x128xf32>
    %8 = arith.mulf %6, %7 : vector<8x128xf32>
    %9 = vector.broadcast %5 : vector<1x128xf32> to vector<8x128xf32>
    %10 = arith.addf %8, %9 : vector<8x128xf32>
    %cst_6 = arith.constant 0.000000e+00 : f32
    %11 = vector.broadcast %cst_6 : f32 to vector<8x128xf32>
    %12 = arith.maximumf %10, %11 : vector<8x128xf32>
    %cst_7 = arith.constant dense<0.000000e+00> : vector<8xf32>
    %13 = vector.multi_reduction <add>, %12, %cst_7 [1] : vector<8x128xf32> to vector<8xf32>
    %14 = vector.shape_cast %13 : vector<8xf32> to vector<8x1xf32>
    %15 = arith.addf %3, %14 : vector<8x1xf32>
    %c0_8 = arith.constant 0 : index
    %c128 = arith.constant 128 : index
    %16 = vector.load %arg2[%c0_8, %c128] : memref<1x896xf32, #tpu.memory_space<vmem>>, vector<1x128xf32>
    %c0_9 = arith.constant 0 : index
    %c128_10 = arith.constant 128 : index
    %17 = vector.load %arg3[%c0_9, %c128_10] : memref<1x896xf32, #tpu.memory_space<vmem>>, vector<1x128xf32>
    %18 = vector.broadcast %2 : vector<8x1xf32> to vector<8x128xf32>
    %19 = vector.broadcast %16 : vector<1x128xf32> to vector<8x128xf32>
    %20 = arith.mulf %18, %19 : vector<8x128xf32>
    %21 = vector.broadcast %17 : vector<1x128xf32> to vector<8x128xf32>
    %22 = arith.addf %20, %21 : vector<8x128xf32>
    %cst_11 = arith.constant 0.000000e+00 : f32
    %23 = vector.broadcast %cst_11 : f32 to vector<8x128xf32>
    %24 = arith.maximumf %22, %23 : vector<8x128xf32>
    %cst_12 = arith.constant dense<0.000000e+00> : vector<8xf32>
    %25 = vector.multi_reduction <add>, %24, %cst_12 [1] : vector<8x128xf32> to vector<8xf32>
    %26 = vector.shape_cast %25 : vector<8xf32> to vector<8x1xf32>
    %27 = arith.addf %15, %26 : vector<8x1xf32>
    %c0_13 = arith.constant 0 : index
    %c256 = arith.constant 256 : index
    %28 = vector.load %arg2[%c0_13, %c256] : memref<1x896xf32, #tpu.memory_space<vmem>>, vector<1x128xf32>
    %c0_14 = arith.constant 0 : index
    %c256_15 = arith.constant 256 : index
    %29 = vector.load %arg3[%c0_14, %c256_15] : memref<1x896xf32, #tpu.memory_space<vmem>>, vector<1x128xf32>
    %30 = vector.broadcast %2 : vector<8x1xf32> to vector<8x128xf32>
    %31 = vector.broadcast %28 : vector<1x128xf32> to vector<8x128xf32>
    %32 = arith.mulf %30, %31 : vector<8x128xf32>
    %33 = vector.broadcast %29 : vector<1x128xf32> to vector<8x128xf32>
    %34 = arith.addf %32, %33 : vector<8x128xf32>
    %cst_16 = arith.constant 0.000000e+00 : f32
    %35 = vector.broadcast %cst_16 : f32 to vector<8x128xf32>
    %36 = arith.maximumf %34, %35 : vector<8x128xf32>
    %cst_17 = arith.constant dense<0.000000e+00> : vector<8xf32>
    %37 = vector.multi_reduction <add>, %36, %cst_17 [1] : vector<8x128xf32> to vector<8xf32>
    %38 = vector.shape_cast %37 : vector<8xf32> to vector<8x1xf32>
    %39 = arith.addf %27, %38 : vector<8x1xf32>
    %c0_18 = arith.constant 0 : index
    %c384 = arith.constant 384 : index
    %40 = vector.load %arg2[%c0_18, %c384] : memref<1x896xf32, #tpu.memory_space<vmem>>, vector<1x128xf32>
    %c0_19 = arith.constant 0 : index
    %c384_20 = arith.constant 384 : index
    %41 = vector.load %arg3[%c0_19, %c384_20] : memref<1x896xf32, #tpu.memory_space<vmem>>, vector<1x128xf32>
    %42 = vector.broadcast %2 : vector<8x1xf32> to vector<8x128xf32>
    %43 = vector.broadcast %40 : vector<1x128xf32> to vector<8x128xf32>
    %44 = arith.mulf %42, %43 : vector<8x128xf32>
    %45 = vector.broadcast %41 : vector<1x128xf32> to vector<8x128xf32>
    %46 = arith.addf %44, %45 : vector<8x128xf32>
    %cst_21 = arith.constant 0.000000e+00 : f32
    %47 = vector.broadcast %cst_21 : f32 to vector<8x128xf32>
    %48 = arith.maximumf %46, %47 : vector<8x128xf32>
    %cst_22 = arith.constant dense<0.000000e+00> : vector<8xf32>
    %49 = vector.multi_reduction <add>, %48, %cst_22 [1] : vector<8x128xf32> to vector<8xf32>
    %50 = vector.shape_cast %49 : vector<8xf32> to vector<8x1xf32>
    %51 = arith.addf %39, %50 : vector<8x1xf32>
    %c0_23 = arith.constant 0 : index
    %c512 = arith.constant 512 : index
    %52 = vector.load %arg2[%c0_23, %c512] : memref<1x896xf32, #tpu.memory_space<vmem>>, vector<1x128xf32>
    %c0_24 = arith.constant 0 : index
    %c512_25 = arith.constant 512 : index
    %53 = vector.load %arg3[%c0_24, %c512_25] : memref<1x896xf32, #tpu.memory_space<vmem>>, vector<1x128xf32>
    %54 = vector.broadcast %2 : vector<8x1xf32> to vector<8x128xf32>
    %55 = vector.broadcast %52 : vector<1x128xf32> to vector<8x128xf32>
    %56 = arith.mulf %54, %55 : vector<8x128xf32>
    %57 = vector.broadcast %53 : vector<1x128xf32> to vector<8x128xf32>
    %58 = arith.addf %56, %57 : vector<8x128xf32>
    %cst_26 = arith.constant 0.000000e+00 : f32
    %59 = vector.broadcast %cst_26 : f32 to vector<8x128xf32>
    %60 = arith.maximumf %58, %59 : vector<8x128xf32>
    %cst_27 = arith.constant dense<0.000000e+00> : vector<8xf32>
    %61 = vector.multi_reduction <add>, %60, %cst_27 [1] : vector<8x128xf32> to vector<8xf32>
    %62 = vector.shape_cast %61 : vector<8xf32> to vector<8x1xf32>
    %63 = arith.addf %51, %62 : vector<8x1xf32>
    %c0_28 = arith.constant 0 : index
    %c640 = arith.constant 640 : index
    %64 = vector.load %arg2[%c0_28, %c640] : memref<1x896xf32, #tpu.memory_space<vmem>>, vector<1x128xf32>
    %c0_29 = arith.constant 0 : index
    %c640_30 = arith.constant 640 : index
    %65 = vector.load %arg3[%c0_29, %c640_30] : memref<1x896xf32, #tpu.memory_space<vmem>>, vector<1x128xf32>
    %66 = vector.broadcast %2 : vector<8x1xf32> to vector<8x128xf32>
    %67 = vector.broadcast %64 : vector<1x128xf32> to vector<8x128xf32>
    %68 = arith.mulf %66, %67 : vector<8x128xf32>
    %69 = vector.broadcast %65 : vector<1x128xf32> to vector<8x128xf32>
    %70 = arith.addf %68, %69 : vector<8x128xf32>
    %cst_31 = arith.constant 0.000000e+00 : f32
    %71 = vector.broadcast %cst_31 : f32 to vector<8x128xf32>
    %72 = arith.maximumf %70, %71 : vector<8x128xf32>
    %cst_32 = arith.constant dense<0.000000e+00> : vector<8xf32>
    %73 = vector.multi_reduction <add>, %72, %cst_32 [1] : vector<8x128xf32> to vector<8xf32>
    %74 = vector.shape_cast %73 : vector<8xf32> to vector<8x1xf32>
    %75 = arith.addf %63, %74 : vector<8x1xf32>
    %c0_33 = arith.constant 0 : index
    %c768 = arith.constant 768 : index
    %76 = vector.load %arg2[%c0_33, %c768] : memref<1x896xf32, #tpu.memory_space<vmem>>, vector<1x128xf32>
    %c0_34 = arith.constant 0 : index
    %c768_35 = arith.constant 768 : index
    %77 = vector.load %arg3[%c0_34, %c768_35] : memref<1x896xf32, #tpu.memory_space<vmem>>, vector<1x128xf32>
    %78 = vector.broadcast %2 : vector<8x1xf32> to vector<8x128xf32>
    %79 = vector.broadcast %76 : vector<1x128xf32> to vector<8x128xf32>
    %80 = arith.mulf %78, %79 : vector<8x128xf32>
    %81 = vector.broadcast %77 : vector<1x128xf32> to vector<8x128xf32>
    %82 = arith.addf %80, %81 : vector<8x128xf32>
    %cst_36 = arith.constant 0.000000e+00 : f32
    %83 = vector.broadcast %cst_36 : f32 to vector<8x128xf32>
    %84 = arith.maximumf %82, %83 : vector<8x128xf32>
    %cst_37 = arith.constant dense<0.000000e+00> : vector<8xf32>
    %85 = vector.multi_reduction <add>, %84, %cst_37 [1] : vector<8x128xf32> to vector<8xf32>
    %86 = vector.shape_cast %85 : vector<8xf32> to vector<8x1xf32>
    %87 = arith.addf %75, %86 : vector<8x1xf32>
    %c0_38 = arith.constant 0 : index
    %c0_39 = arith.constant 0 : index
    %88 = vector.load %arg4[%c0_38, %c0_39] : memref<1x128xf32, #tpu.memory_space<vmem>>, vector<1x128xf32>
    %89 = vector.broadcast %87 : vector<8x1xf32> to vector<8x128xf32>
    %90 = vector.broadcast %88 : vector<1x128xf32> to vector<8x128xf32>
    %91 = arith.mulf %89, %90 : vector<8x128xf32>
    %c0_40 = arith.constant 0 : index
    %c0_41 = arith.constant 0 : index
    %92 = vector.load %arg5[%c0_40, %c0_41] : memref<1x128xf32, #tpu.memory_space<vmem>>, vector<1x128xf32>
    %93 = vector.broadcast %92 : vector<1x128xf32> to vector<8x128xf32>
    %94 = arith.addf %91, %93 : vector<8x128xf32>
    %cst_42 = arith.constant 0.000000e+00 : f32
    %95 = vector.broadcast %cst_42 : f32 to vector<8x128xf32>
    %96 = arith.maximumf %94, %95 : vector<8x128xf32>
    %cst_43 = arith.constant dense<0xFF800000> : vector<8xf32>
    %97 = vector.multi_reduction <maximumf>, %96, %cst_43 [1] : vector<8x128xf32> to vector<8xf32>
    %98 = vector.shape_cast %97 : vector<8xf32> to vector<8x1xf32>
    %99 = vector.broadcast %98 : vector<8x1xf32> to vector<8x128xf32>
    %100 = arith.subf %96, %99 : vector<8x128xf32>
    %101 = math.exp %100 : vector<8x128xf32>
    %c0_44 = arith.constant 0 : index
    %c0_45 = arith.constant 0 : index
    %102 = vector.load %arg6[%c0_44, %c0_45] : memref<1x128xf32, #tpu.memory_space<vmem>>, vector<1x128xf32>
    %103 = vector.broadcast %102 : vector<1x128xf32> to vector<8x128xf32>
    %104 = arith.mulf %101, %103 : vector<8x128xf32>
    %cst_46 = arith.constant dense<0.000000e+00> : vector<8xf32>
    %105 = vector.multi_reduction <add>, %104, %cst_46 [1] : vector<8x128xf32> to vector<8xf32>
    %106 = vector.shape_cast %105 : vector<8xf32> to vector<8x1xf32>
    %107 = tpu.reciprocal %106 : vector<8x1xf32> -> vector<8x1xf32>
    %108 = vector.broadcast %107 : vector<8x1xf32> to vector<8x128xf32>
    %109 = arith.mulf %104, %108 : vector<8x128xf32>
    %c0_47 = arith.constant 0 : index
    %c0_48 = arith.constant 0 : index
    %110 = vector.load %arg7[%c0_47, %c0_48] : memref<8x128xf32, #tpu.memory_space<vmem>>, vector<8x128xf32>
    tpu.vector_store %arg7[%c0_47, %c0_48], %109 {strides = array<i32>} : memref<8x128xf32, #tpu.memory_space<vmem>>, vector<8x128xf32>,
    return
  }
  func.func @transform_0(%arg0: i32) -> (i32, i32) {
    %c0_i32 = arith.constant 0 : i32
    %c0_i32_0 = arith.constant 0 : i32
    return %arg0, %c0_i32 : i32, i32
  }
  func.func @transform_1(%arg0: i32) -> (i32, i32) {
    %c0_i32 = arith.constant 0 : i32
    %c0_i32_0 = arith.constant 0 : i32
    %c0_i32_1 = arith.constant 0 : i32
    return %c0_i32, %c0_i32_0 : i32, i32
  }
  func.func @transform_2(%arg0: i32) -> (i32, i32) {
    %c0_i32 = arith.constant 0 : i32
    %c0_i32_0 = arith.constant 0 : i32
    %c0_i32_1 = arith.constant 0 : i32
    return %c0_i32, %c0_i32_0 : i32, i32
  }
  func.func @transform_3(%arg0: i32) -> (i32, i32) {
    %c0_i32 = arith.constant 0 : i32
    %c0_i32_0 = arith.constant 0 : i32
    %c0_i32_1 = arith.constant 0 : i32
    return %c0_i32, %c0_i32_0 : i32, i32
  }
  func.func @transform_4(%arg0: i32) -> (i32, i32) {
    %c0_i32 = arith.constant 0 : i32
    %c0_i32_0 = arith.constant 0 : i32
    %c0_i32_1 = arith.constant 0 : i32
    return %c0_i32, %c0_i32_0 : i32, i32
  }
  func.func @transform_5(%arg0: i32) -> (i32, i32) {
    %c0_i32 = arith.constant 0 : i32
    %c0_i32_0 = arith.constant 0 : i32
    %c0_i32_1 = arith.constant 0 : i32
    return %c0_i32, %c0_i32_0 : i32, i32
  }
  func.func @transform_6(%arg0: i32) -> (i32, i32) {
    %c0_i32 = arith.constant 0 : i32
    %c0_i32_0 = arith.constant 0 : i32
    return %arg0, %c0_i32 : i32, i32
  }
}

</mosaic_0001>

<llo_original>
// kernel: tpu_custom_call.1
$region0: #{tpu_custom_call.1}
  #allocation0 [shape = 'u32[]', space=smem, size = 0x4, offset = 0x4, fixed_abs, tag = 'smem constant byte address 0x4 - core index']
  #allocation1 [shape = 'u32[144,128]{1,0:T(1,128)}', space=vmem, size = 0x12000, scoped, tag = 'internal scratch']
  %s0 = inlined_call_operand.hbm [shape: f32[8,784], index: 0, kind: input, shape index: {}]
  %s1 = inlined_call_operand.hbm [shape: f32[1,896], index: 1, kind: input, shape index: {}]
  %s2 = inlined_call_operand.hbm [shape: f32[1,896], index: 2, kind: input, shape index: {}]
  %s3 = inlined_call_operand.vmem [shape: f32[1,128], index: 3, kind: input, shape index: {}]
  %s4 = inlined_call_operand.vmem [shape: f32[1,128], index: 4, kind: input, shape index: {}]
  %s5 = inlined_call_operand.vmem [shape: f32[1,128], index: 5, kind: input, shape index: {}]
  %s6 = inlined_call_operand.hbm [shape: f32[8,128], index: 6, kind: output, shape index: {}]
  %s7 = sld [smem:[#allocation0]]
  $region46: #{tpu_custom_call.1} parent=0
    _
  %s9 = ssub.s32 1, %s7
  %s10 = scalar_select 0, %s9, %s7
  $region1: #{tpu_custom_call.1} parent=0
    #allocation2 [shape = 'u8[28672]{0}', space=vmem, size = 0x7000, scoped, tag = 'input window, operand 0, single buffered']
    #allocation3 [shape = 's32[1]{0}', space=sflag, size = 0x4, scoped, tag = 'scoped memory for tpu_custom_call.1']
    #allocation4 [shape = 's32[1]{0}', space=sflag, size = 0x4, scoped, tag = 'scoped memory for tpu_custom_call.1']
    #allocation5 [shape = 'u8[3584]{0}', space=vmem, size = 0x1000, scoped, tag = 'input window, operand 1, single buffered']
    #allocation6 [shape = 's32[1]{0}', space=sflag, size = 0x4, scoped, tag = 'scoped memory for tpu_custom_call.1']
    #allocation7 [shape = 'u8[3584]{0}', space=vmem, size = 0x1000, scoped, tag = 'input window, operand 2, single buffered']
    #allocation8 [shape = 'u8[4096]{0}', space=vmem, size = 0x1000, scoped, tag = 'output window, operand 0, single buffered']
    %11 = vsyncpa [#allocation3], 0
    %12 = vsyncpa [#allocation6], 0
    %13 = vsyncpa [#allocation4], 0
    // Predicated region
    $region2: #{tpu_custom_call.1} parent=1 // pred_check
      _
    $region3: #{tpu_custom_call.1} parent=1 // pred_check_branch
      %15 = sbr.rel (0) target = $region5
    $region4: #{tpu_custom_call.1} parent=1 // pred_region
      %s17 = ssub.s32 896, 896
      %18 = vsyncadd [#allocation3], %s17
      %s20 = sshll.u32 [#allocation2], 4
      %s21 = int_to_ptr.vmem [resolvable:$true] %s20
      %23 = dma.hbm_to_vmem [thread:$0]  %s0, 896, %s21, [#allocation3]
    $region5: #{tpu_custom_call.1} parent=1 // pred_fallthru
      _
    // Predicated region
    $region6: #{tpu_custom_call.1} parent=1 // pred_check
      _
    $region7: #{tpu_custom_call.1} parent=1 // pred_check_branch
      %25 = sbr.rel (0) target = $region9
    $region8: #{tpu_custom_call.1} parent=1 // pred_region
      %s27 = ssub.s32 112, 112
      %28 = vsyncadd [#allocation6], %s27
      %s30 = sshll.u32 [#allocation5], 4
      %s31 = int_to_ptr.vmem [resolvable:$true] %s30
      %33 = dma.hbm_to_vmem [thread:$0]  %s1, 112, %s31, [#allocation6]
    $region9: #{tpu_custom_call.1} parent=1 // pred_fallthru
      _
    // Predicated region
    $region10: #{tpu_custom_call.1} parent=1 // pred_check
      _
    $region11: #{tpu_custom_call.1} parent=1 // pred_check_branch
      %35 = sbr.rel (0) target = $region13
    $region12: #{tpu_custom_call.1} parent=1 // pred_region
      %s37 = ssub.s32 112, 112
      %38 = vsyncadd [#allocation6], %s37
      %s40 = sshll.u32 [#allocation7], 4
      %s41 = int_to_ptr.vmem [resolvable:$true] %s40
      %43 = dma.hbm_to_vmem [thread:$0]  %s2, 112, %s41, [#allocation6]
    $region13: #{tpu_custom_call.1} parent=1 // pred_fallthru
      _
    // Predicated region
    $region14: #{tpu_custom_call.1} parent=1 // pred_check
      _
    $region15: #{tpu_custom_call.1} parent=1 // pred_check_branch
      %45 = sbr.rel (0) target = $region17
    $region16: #{tpu_custom_call.1} parent=1 // pred_region
      _
    $region17: #{tpu_custom_call.1} parent=1 // pred_fallthru
      _
    // Predicated region
    $region18: #{tpu_custom_call.1} parent=1 // pred_check
      _
    $region19: #{tpu_custom_call.1} parent=1 // pred_check_branch
      %47 = sbr.rel (0) target = $region21
    $region20: #{tpu_custom_call.1} parent=1 // pred_region
      _
    $region21: #{tpu_custom_call.1} parent=1 // pred_fallthru
      _
    // Predicated region
    $region22: #{tpu_custom_call.1} parent=1 // pred_check
      _
    $region23: #{tpu_custom_call.1} parent=1 // pred_check_branch
      %49 = sbr.rel (0) target = $region25
    $region24: #{tpu_custom_call.1} parent=1 // pred_region
      _
    $region25: #{tpu_custom_call.1} parent=1 // pred_fallthru
      _
    // Predicated region
    $region26: #{tpu_custom_call.1} parent=1 // pred_check
      _
    $region27: #{tpu_custom_call.1} parent=1 // pred_check_branch
      %51 = sbr.rel (0) target = $region29
    $region28: #{tpu_custom_call.1} parent=1 // pred_region
      %52 = dma.done [#allocation3], 896
    $region29: #{tpu_custom_call.1} parent=1 // pred_fallthru
      _
    // Predicated region
    $region30: #{tpu_custom_call.1} parent=1 // pred_check
      _
    $region31: #{tpu_custom_call.1} parent=1 // pred_check_branch
      %54 = sbr.rel (0) target = $region33
    $region32: #{tpu_custom_call.1} parent=1 // pred_region
      %55 = dma.done [#allocation6], 112
    $region33: #{tpu_custom_call.1} parent=1 // pred_fallthru
      _
    // Predicated region
    $region34: #{tpu_custom_call.1} parent=1 // pred_check
      _
    $region35: #{tpu_custom_call.1} parent=1 // pred_check_branch
      %57 = sbr.rel (0) target = $region37
    $region36: #{tpu_custom_call.1} parent=1 // pred_region
      %58 = dma.done [#allocation6], 112
    $region37: #{tpu_custom_call.1} parent=1 // pred_fallthru
      _
    %v59 = vld [vmem:[#allocation2] sm:$0xff]
    %v60 = vld [vmem:[#allocation2 + $0x8] sm:$0xff]
    %v61 = vld [vmem:[#allocation2 + $0x10] sm:$0xff]
    %v62 = vld [vmem:[#allocation2 + $0x18] sm:$0xff]
    %v63 = vld [vmem:[#allocation2 + $0x20] sm:$0xff]
    %v64 = vld [vmem:[#allocation2 + $0x28] sm:$0xff]
    %v65 = vld [vmem:[#allocation2 + $0x30] sm:$0xff]
    %v66 = vadd.f32 %v59, %v60
    %v67 = vadd.f32 %v66, %v61
    %v68 = vadd.f32 %v67, %v62
    %v69 = vadd.f32 %v68, %v63
    %v70 = vadd.f32 %v69, %v64
    %vm71 = vcmask 130048
    %v72 = vsel %vm71, %v65, 0.0
    %v73 = vadd.f32 %v70, %v72
    %74 = vadd.xlane.f32.xlu0 %v73
    %v75 = vpop.xlane.xlu0 %74
    %v76 = vld [vmem:[#allocation5] sm:$0x1]
    %v77 = vld [vmem:[#allocation7] sm:$0x1]
    %v79 = vlaneseq
    %v80 = vshrl.u32 %v79, 7
    %v81 = vsub.s32 0, %v80
    %v82 = vrot.slane %v76, %v81
    %v84 = vmul.f32 %v75, %v82
    %v86 = vlaneseq
    %v87 = vshrl.u32 %v86, 7
    %v88 = vsub.s32 0, %v87
    %v89 = vrot.slane %v77, %v88
    %v91 = vadd.f32 %v84, %v89
    %v92 = vmax.f32 %v91, 0.0
    %93 = vadd.xlane.f32.xlu0 %v92
    %v94 = vpop.xlane.xlu0 %93
    %v95 = vadd.f32 %v94, 0.0
    %v96 = vld [vmem:[#allocation5 + $0x1] sm:$0x1]
    %v97 = vld [vmem:[#allocation7 + $0x1] sm:$0x1]
    %v99 = vlaneseq
    %v100 = vshrl.u32 %v99, 7
    %v101 = vsub.s32 0, %v100
    %v102 = vrot.slane %v96, %v101
    %v104 = vmul.f32 %v75, %v102
    %v106 = vlaneseq
    %v107 = vshrl.u32 %v106, 7
    %v108 = vsub.s32 0, %v107
    %v109 = vrot.slane %v97, %v108
    %v111 = vadd.f32 %v104, %v109
    %v112 = vmax.f32 %v111, 0.0
    %113 = vadd.xlane.f32.xlu0 %v112
    %v114 = vpop.xlane.xlu0 %113
    %v115 = vadd.f32 %v95, %v114
    %v116 = vld [vmem:[#allocation5 + $0x2] sm:$0x1]
    %v117 = vld [vmem:[#allocation7 + $0x2] sm:$0x1]
    %v119 = vlaneseq
    %v120 = vshrl.u32 %v119, 7
    %v121 = vsub.s32 0, %v120
    %v122 = vrot.slane %v116, %v121
    %v124 = vmul.f32 %v75, %v122
    %v126 = vlaneseq
    %v127 = vshrl.u32 %v126, 7
    %v128 = vsub.s32 0, %v127
    %v129 = vrot.slane %v117, %v128
    %v131 = vadd.f32 %v124, %v129
    %v132 = vmax.f32 %v131, 0.0
    %133 = vadd.xlane.f32.xlu0 %v132
    %v134 = vpop.xlane.xlu0 %133
    %v135 = vadd.f32 %v115, %v134
    %v136 = vld [vmem:[#allocation5 + $0x3] sm:$0x1]
    %v137 = vld [vmem:[#allocation7 + $0x3] sm:$0x1]
    %v139 = vlaneseq
    %v140 = vshrl.u32 %v139, 7
    %v141 = vsub.s32 0, %v140
    %v142 = vrot.slane %v136, %v141
    %v144 = vmul.f32 %v75, %v142
    %v146 = vlaneseq
    %v147 = vshrl.u32 %v146, 7
    %v148 = vsub.s32 0, %v147
    %v149 = vrot.slane %v137, %v148
    %v151 = vadd.f32 %v144, %v149
    %v152 = vmax.f32 %v151, 0.0
    %153 = vadd.xlane.f32.xlu0 %v152
    %v154 = vpop.xlane.xlu0 %153
    %v155 = vadd.f32 %v135, %v154
    %v156 = vld [vmem:[#allocation5 + $0x4] sm:$0x1]
    %v157 = vld [vmem:[#allocation7 + $0x4] sm:$0x1]
    %v159 = vlaneseq
    %v160 = vshrl.u32 %v159, 7
    %v161 = vsub.s32 0, %v160
    %v162 = vrot.slane %v156, %v161
    %v164 = vmul.f32 %v75, %v162
    %v166 = vlaneseq
    %v167 = vshrl.u32 %v166, 7
    %v168 = vsub.s32 0, %v167
    %v169 = vrot.slane %v157, %v168
    %v171 = vadd.f32 %v164, %v169
    %v172 = vmax.f32 %v171, 0.0
    %173 = vadd.xlane.f32.xlu0 %v172
    %v174 = vpop.xlane.xlu0 %173
    %v175 = vadd.f32 %v155, %v174
    %v176 = vld [vmem:[#allocation5 + $0x5] sm:$0x1]
    %v177 = vld [vmem:[#allocation7 + $0x5] sm:$0x1]
    %v179 = vlaneseq
    %v180 = vshrl.u32 %v179, 7
    %v181 = vsub.s32 0, %v180
    %v182 = vrot.slane %v176, %v181
    %v184 = vmul.f32 %v75, %v182
    %v186 = vlaneseq
    %v187 = vshrl.u32 %v186, 7
    %v188 = vsub.s32 0, %v187
    %v189 = vrot.slane %v177, %v188
    %v191 = vadd.f32 %v184, %v189
    %v192 = vmax.f32 %v191, 0.0
    %193 = vadd.xlane.f32.xlu0 %v192
    %v194 = vpop.xlane.xlu0 %193
    %v195 = vadd.f32 %v175, %v194
    %v196 = vld [vmem:[#allocation5 + $0x6] sm:$0x1]
    %v197 = vld [vmem:[#allocation7 + $0x6] sm:$0x1]
    %v199 = vlaneseq
    %v200 = vshrl.u32 %v199, 7
    %v201 = vsub.s32 0, %v200
    %v202 = vrot.slane %v196, %v201
    %v204 = vmul.f32 %v75, %v202
    %v206 = vlaneseq
    %v207 = vshrl.u32 %v206, 7
    %v208 = vsub.s32 0, %v207
    %v209 = vrot.slane %v197, %v208
    %v211 = vadd.f32 %v204, %v209
    %v212 = vmax.f32 %v211, 0.0
    %213 = vadd.xlane.f32.xlu0 %v212
    %v214 = vpop.xlane.xlu0 %213
    %v215 = vadd.f32 %v195, %v214
    %v216 = vld [vmem:[%s3] sm:$0x1]
    %v218 = vlaneseq
    %v219 = vshrl.u32 %v218, 7
    %v220 = vsub.s32 0, %v219
    %v221 = vrot.slane %v216, %v220
    %v223 = vmul.f32 %v215, %v221
    %v224 = vld [vmem:[%s4] sm:$0x1]
    %v226 = vlaneseq
    %v227 = vshrl.u32 %v226, 7
    %v228 = vsub.s32 0, %v227
    %v229 = vrot.slane %v224, %v228
    %v231 = vadd.f32 %v223, %v229
    %v232 = vmax.f32 %v231, 0.0
    %233 = vmax.xlane.f32.xlu0 %v232
    %v234 = vpop.xlane.xlu0 %233
    %v235 = vsub.f32 %v232, %v234
    %v236 = vmul.f32 %v235, 1.442695
    %v237 = vpow.pop %v236
    %v238 = vld [vmem:[%s5] sm:$0x1]
    %v240 = vlaneseq
    %v241 = vshrl.u32 %v240, 7
    %v242 = vsub.s32 0, %v241
    %v243 = vrot.slane %v238, %v242
    %v245 = vmul.f32 %v237, %v243
    %246 = vadd.xlane.f32.xlu0 %v245
    %v247 = vpop.xlane.xlu0 %246
    %v248 = vrcp.pop %v247
    %v249 = vmul.f32 %v245, %v248
    %250 = vst [vmem:[#allocation8] sm:$0xff] %v249
    // Predicated region
    $region38: #{tpu_custom_call.1} parent=1 // pred_check
      _
    $region39: #{tpu_custom_call.1} parent=1 // pred_check_branch
      %252 = sbr.rel (0) target = $region41
    $region40: #{tpu_custom_call.1} parent=1 // pred_region
      %s254 = ssub.s32 128, 128
      %255 = vsyncadd [#allocation4], %s254
      %s257 = sshll.u32 [#allocation8], 4
      %s258 = int_to_ptr.vmem [resolvable:$true] %s257
      %260 = dma.vmem_to_hbm [thread:$0]  %s258, 128, %s6, [#allocation4]
    $region41: #{tpu_custom_call.1} parent=1 // pred_fallthru
      _
    // Predicated region
    $region42: #{tpu_custom_call.1} parent=1 // pred_check
      _
    $region43: #{tpu_custom_call.1} parent=1 // pred_check_branch
      %262 = sbr.rel (0) target = $region45
    $region44: #{tpu_custom_call.1} parent=1 // pred_region
      %263 = dma.done [#allocation4], 128
    $region45: #{tpu_custom_call.1} parent=1 // pred_fallthru
      _
    %264 = vsyncpa [#allocation3], 1
    %265 = vsyncpa [#allocation6], 1
    %266 = vsyncpa [#allocation4], 1

</llo_original>
